<compile_context>
chip_gen: v7x
topology: tpu7x:2x2x1
jax: 0.10.0
libtpu: 0.0.40
codegen_flags: <defaults>
</compile_context>

<pallas_src>
import functools

import jax
import jax.numpy as jnp
from jax.experimental import pallas as pl
from jax.experimental.pallas import tpu as pltpu


def _maxpool_same_kernel(x_ref, o_ref, *, H, W):
    # x_ref / o_ref: (tc, H*W) block in VMEM; each row is one flattened (H, W) plane.
    x = x_ref[...]
    hw = H * W
    dt = x.dtype

    if jnp.issubdtype(dt, jnp.floating):
        lo = jnp.array(-jnp.inf, dt)
        hi = jnp.array(jnp.inf, dt)
    else:
        lo = jnp.array(jnp.iinfo(dt).min, dt)
        hi = jnp.array(jnp.iinfo(dt).max, dt)

    # One-row lane index: the edge-limit rows below are (1, hw) and broadcast
    # along sublanes, so per-element work is just min (broadcast) + max.
    col = jax.lax.broadcasted_iota(jnp.int32, (1, hw), 1)

    # Horizontal 1x2 max with replicate pad on the right edge:
    #   right[k] = x[k + 1], except at column W-1 where the padded neighbour is
    #   x[k] itself; clamping the rolled value to -inf there makes max() ignore it.
    if W > 1:
        edge_h = jnp.where(col % W == W - 1, lo, hi)          # (1, hw)
        x_right = pltpu.roll(x, shift=hw - 1, axis=1)          # x[(k + 1) % hw]
        m = jnp.maximum(x, jnp.minimum(x_right, edge_h))
    else:
        m = x

    # Vertical 2x1 max with replicate pad on the bottom edge.
    if H > 1:
        edge_v = jnp.where(col >= (H - 1) * W, lo, hi)         # (1, hw)
        m_down = pltpu.roll(m, shift=hw - W, axis=1)            # m[(k + W) % hw]
        out = jnp.maximum(m, jnp.minimum(m_down, edge_v))
    else:
        out = m

    o_ref[...] = out


def _choose_block_rows(nc, plane_bytes, *, target_bytes=4 << 20,
                       min_block_bytes=512 << 10, min_steps=8):
    """Rows (flattened planes) per grid block, multiple of 8 (or the full array).

    Aims for >= `min_steps` grid steps when there is enough work (DMA/compute
    overlap + both v7x TensorCores via the "parallel" axis), but never lets a
    block drop below ~0.5 MiB (per-step overhead ~0.35 us) or grow above ~4 MiB
    (VMEM budget incl. double buffering and roll temporaries).
    """
    total = nc * plane_bytes
    desired = max(min_block_bytes, min(target_bytes, total // min_steps))
    # TODO(synk): for very large planes (plane_bytes >> target_bytes) an
    # hw-tiled path with a W-row halo would be needed to keep blocks small.
    tc = max(8, (desired // max(plane_bytes, 1)) // 8 * 8)
    if tc >= nc:
        return nc  # single block == full array (any row count is legal then)
    return tc


def maxpool_same_size(x, *, block_rows=None):
    """Equivalent of:
         F.pad(x, (0, 1, 0, 1), mode='replicate') -> MaxPool2d(kernel_size=2, stride=1)
       Input/output: (N, C, H, W), same dtype, same spatial size.
    """
    N, C, H, W = x.shape
    nc, hw = N * C, H * W
    itemsize = jnp.dtype(x.dtype).itemsize

    xr = x.reshape(nc, hw)  # merges contiguous dims: free, no extra HBM pass

    tc = block_rows if block_rows is not None else _choose_block_rows(nc, hw * itemsize)

    # Explicit scoped-VMEM budget: in+out double-buffered (4x block) plus roll /
    # broadcast temporaries; covers v5e's 16 MiB scoped default and stays within
    # v7x's 64 MiB physical VMEM.
    hw_pad = -(-hw // 128) * 128
    tc_pad = -(-tc // 8) * 8
    block_bytes = tc_pad * hw_pad * itemsize
    vmem_limit = int(min(64 << 20, max(32 << 20, 10 * block_bytes)))

    kernel = functools.partial(_maxpool_same_kernel, H=H, W=W)

    out = pl.pallas_call(
        kernel,
        out_shape=jax.ShapeDtypeStruct((nc, hw), x.dtype),
        grid=(pl.cdiv(nc, tc),),
        in_specs=[pl.BlockSpec((tc, hw), lambda i: (i, 0))],
        out_specs=pl.BlockSpec((tc, hw), lambda i: (i, 0)),
        compiler_params=pltpu.CompilerParams(
            dimension_semantics=("parallel",),
            vmem_limit_bytes=vmem_limit,
        ),
    )(xr)

    return out.reshape(N, C, H, W)


def _reference(x):
    # Pure-JAX reference: replicate-pad right/bottom by 1, 2x2 max, stride 1.
    xp = jnp.pad(x, ((0, 0), (0, 0), (0, 1), (0, 1)), mode="edge")
    return jnp.maximum(
        jnp.maximum(xp[:, :, :-1, :-1], xp[:, :, :-1, 1:]),
        jnp.maximum(xp[:, :, 1:, :-1], xp[:, :, 1:, 1:]),
    )


if __name__ == "__main__":
    # Primary shape from the module spec.
    x = jax.random.normal(jax.random.PRNGKey(0), (2, 4, 16, 16), dtype=jnp.float32)
    y = maxpool_same_size(x)
    jax.block_until_ready(y)
    assert y.shape == x.shape
    assert jnp.array_equal(y, _reference(x)), "Pallas maxpool mismatch"

    # Ragged multi-block grid: nc=15 with block_rows=8 -> 2 steps, masked tail block.
    x2 = jax.random.normal(jax.random.PRNGKey(1), (3, 5, 8, 8), dtype=jnp.float32)
    y2 = maxpool_same_size(x2, block_rows=8)
    jax.block_until_ready(y2)
    assert jnp.array_equal(y2, _reference(x2)), "Pallas maxpool (ragged grid) mismatch"

    # Auto-chosen multi-step grid (nc=512 -> 4 blocks of 128 rows).
    x3 = jax.random.normal(jax.random.PRNGKey(2), (8, 64, 32, 32), dtype=jnp.float32)
    y3 = maxpool_same_size(x3)
    jax.block_until_ready(y3)
    assert jnp.array_equal(y3, _reference(x3)), "Pallas maxpool (auto grid) mismatch"

    print("KERNEL_OK")
</pallas_src>

<mosaic_0001>
module attributes {stable_mosaic.version = 11 : i64} {
  func.func @_maxpool_same_kernel(%arg0: i32, %arg1: memref<8x256xf32, #tpu.memory_space<vmem>>, %arg2: memref<8x256xf32, #tpu.memory_space<vmem>>) attributes {dimension_semantics = [#tpu.dimension_semantics<parallel>], iteration_bounds = array<i64: 1>, scalar_prefetch = 0 : i64, scratch_operands = 0 : i64, tpu.core_type = #tpu.core_type<tc>, window_params = [{transform_indices = @transform_0, window_bounds = array<i64: 8, 256>}, {transform_indices = @transform_1, window_bounds = array<i64: 8, 256>}]} {
    %c0 = arith.constant 0 : index
    %c0_0 = arith.constant 0 : index
    %0 = vector.load %arg1[%c0, %c0_0] : memref<8x256xf32, #tpu.memory_space<vmem>>, vector<8x256xf32>
    %1 = tpu.iota {dimensions = array<i32: 1>} : vector<1x256xi32>
    %c16_i32 = arith.constant 16 : i32
    %c0_i32 = arith.constant 0 : i32
    %2 = arith.cmpi eq, %c16_i32, %c0_i32 : i32
    %c1_i32 = arith.constant 1 : i32
    %3 = arith.select %2, %c1_i32, %c16_i32 : i32
    %4 = vector.broadcast %3 : i32 to vector<1x256xi32>
    %5 = arith.remsi %1, %4 : vector<1x256xi32>
    %c0_i32_1 = arith.constant 0 : i32
    %6 = vector.broadcast %c0_i32_1 : i32 to vector<1x256xi32>
    %7 = arith.cmpi ne, %5, %6 : vector<1x256xi32>
    %c0_i32_2 = arith.constant 0 : i32
    %8 = vector.broadcast %c0_i32_2 : i32 to vector<1x256xi32>
    %9 = arith.cmpi slt, %5, %8 : vector<1x256xi32>
    %c0_i32_3 = arith.constant 0 : i32
    %10 = arith.cmpi slt, %3, %c0_i32_3 : i32
    %11 = vector.broadcast %10 : i1 to vector<1x256xi1>
    %12 = vector.broadcast %11 : vector<1x256xi1> to vector<1x256xi1>
    %13 = arith.xori %9, %12 : vector<1x256xi1>
    %14 = arith.andi %13, %7 : vector<1x256xi1>
    %15 = vector.broadcast %3 : i32 to vector<1x256xi32>
    %16 = arith.addi %5, %15 : vector<1x256xi32>
    %17 = arith.select %14, %16, %5 : vector<1x256xi1>, vector<1x256xi32>
    %c15_i32 = arith.constant 15 : i32
    %18 = vector.broadcast %c15_i32 : i32 to vector<1x256xi32>
    %19 = arith.cmpi eq, %17, %18 : vector<1x256xi32>
    %cst = arith.constant 0xFF800000 : f32
    %cst_4 = arith.constant 0x7F800000 : f32
    %20 = vector.broadcast %cst : f32 to vector<1x256xf32>
    %21 = vector.broadcast %cst_4 : f32 to vector<1x256xf32>
    %22 = arith.select %19, %20, %21 : vector<1x256xi1>, vector<1x256xf32>
    %c255_i32 = arith.constant 255 : i32
    %23 = tpu.dynamic_rotate %0 by %c255_i32 dim 1 : vector<8x256xf32>, i32 -> vector<8x256xf32>
    %24 = vector.broadcast %22 : vector<1x256xf32> to vector<8x256xf32>
    %25 = arith.minimumf %23, %24 : vector<8x256xf32>
    %26 = arith.maximumf %0, %25 : vector<8x256xf32>
    %c240_i32 = arith.constant 240 : i32
    %27 = vector.broadcast %c240_i32 : i32 to vector<1x256xi32>
    %28 = arith.cmpi sge, %1, %27 : vector<1x256xi32>
    %cst_5 = arith.constant 0xFF800000 : f32
    %cst_6 = arith.constant 0x7F800000 : f32
    %29 = vector.broadcast %cst_5 : f32 to vector<1x256xf32>
    %30 = vector.broadcast %cst_6 : f32 to vector<1x256xf32>
    %31 = arith.select %28, %29, %30 : vector<1x256xi1>, vector<1x256xf32>
    %c240_i32_7 = arith.constant 240 : i32
    %32 = tpu.dynamic_rotate %26 by %c240_i32_7 dim 1 : vector<8x256xf32>, i32 -> vector<8x256xf32>
    %33 = vector.broadcast %31 : vector<1x256xf32> to vector<8x256xf32>
    %34 = arith.minimumf %32, %33 : vector<8x256xf32>
    %35 = arith.maximumf %26, %34 : vector<8x256xf32>
    %c0_8 = arith.constant 0 : index
    %c0_9 = arith.constant 0 : index
    %36 = vector.load %arg2[%c0_8, %c0_9] : memref<8x256xf32, #tpu.memory_space<vmem>>, vector<8x256xf32>
    tpu.vector_store %arg2[%c0_8, %c0_9], %35 {strides = array<i32>} : memref<8x256xf32, #tpu.memory_space<vmem>>, vector<8x256xf32>,
    return
  }
  func.func @transform_0(%arg0: i32) -> (i32, i32) {
    %c0_i32 = arith.constant 0 : i32
    %c0_i32_0 = arith.constant 0 : i32
    return %arg0, %c0_i32 : i32, i32
  }
  func.func @transform_1(%arg0: i32) -> (i32, i32) {
    %c0_i32 = arith.constant 0 : i32
    %c0_i32_0 = arith.constant 0 : i32
    return %arg0, %c0_i32 : i32, i32
  }
}

</mosaic_0001>

<llo_original>
// kernel: tpu_custom_call.1
$region0: #{tpu_custom_call.1}
  #allocation0 [shape = 'u32[]', space=smem, size = 0x4, offset = 0x4, fixed_abs, tag = 'smem constant byte address 0x4 - core index']
  #allocation1 [shape = 'u32[144,128]{1,0:T(1,128)}', space=vmem, size = 0x12000, scoped, tag = 'internal scratch']
  %s0 = inlined_call_operand.hbm [shape: f32[8,256], index: 0, kind: input, shape index: {}]
  %s1 = inlined_call_operand.hbm [shape: f32[8,256], index: 1, kind: output, shape index: {}]
  %s2 = sld [smem:[#allocation0]]
  $region18: #{tpu_custom_call.1} parent=0
    _
  %s4 = ssub.s32 1, %s2
  %s5 = scalar_select 0, %s4, %s2
  $region1: #{tpu_custom_call.1} parent=0
    #allocation2 [shape = 'u8[8192]{0}', space=vmem, size = 0x2000, scoped, tag = 'input window, operand 0, single buffered']
    #allocation3 [shape = 's32[1]{0}', space=sflag, size = 0x4, scoped, tag = 'scoped memory for tpu_custom_call.1']
    #allocation4 [shape = 's32[1]{0}', space=sflag, size = 0x4, scoped, tag = 'scoped memory for tpu_custom_call.1']
    #allocation5 [shape = 'u8[8192]{0}', space=vmem, size = 0x2000, scoped, tag = 'output window, operand 0, single buffered']
    %6 = vsyncpa [#allocation3], 0
    %7 = vsyncpa [#allocation4], 0
    // Predicated region
    $region2: #{tpu_custom_call.1} parent=1 // pred_check
      _
    $region3: #{tpu_custom_call.1} parent=1 // pred_check_branch
      %9 = sbr.rel (0) target = $region5
    $region4: #{tpu_custom_call.1} parent=1 // pred_region
      %s11 = ssub.s32 256, 256
      %12 = vsyncadd [#allocation3], %s11
      %s14 = sshll.u32 [#allocation2], 4
      %s15 = int_to_ptr.vmem [resolvable:$true] %s14
      %17 = dma.hbm_to_vmem [thread:$0]  %s0, 256, %s15, [#allocation3]
    $region5: #{tpu_custom_call.1} parent=1 // pred_fallthru
      _
    // Predicated region
    $region6: #{tpu_custom_call.1} parent=1 // pred_check
      _
    $region7: #{tpu_custom_call.1} parent=1 // pred_check_branch
      %19 = sbr.rel (0) target = $region9
    $region8: #{tpu_custom_call.1} parent=1 // pred_region
      %20 = dma.done [#allocation3], 256
    $region9: #{tpu_custom_call.1} parent=1 // pred_fallthru
      _
    %v21 = vld [vmem:[#allocation2] sm:$0xff]
    %v22 = vld [vmem:[#allocation2 + $0x8] sm:$0xff]
    %v23 = vlaneseq
    %v24 = vand.u32 %v23, 127
    %v25 = vadd.s32 %v24, 128
    %vm26 = vcmp.lt.s32.totalorder %v24, 0
    %v27 = vsub.s32 0, %v24
    %v28 = vsel %vm26, %v27, %v24
    %v29 = vshrl.u32 %v28, 4
    %v30 = vand.u32 %v28, 15
    %v31 = vsub.s32 0, %v30
    %v32 = vsel %vm26, %v31, %v30
    %vm33 = vcmp.lt.s32.totalorder %v25, 0
    %v34 = vsub.s32 0, %v25
    %v35 = vsel %vm33, %v34, %v25
    %v36 = vshrl.u32 %v35, 4
    %v37 = vand.u32 %v35, 15
    %v38 = vsub.s32 0, %v37
    %v39 = vsel %vm33, %v38, %v37
    %vm40 = vcmp.ne.s32.totalorder %v32, 0
    %vm41 = vcmp.ne.s32.totalorder %v39, 0
    %vm42 = vcmp.lt.s32.totalorder %v32, 0
    %vm43 = vcmp.lt.s32.totalorder %v39, 0
    %vm44 = vmand %vm42, %vm40
    %vm45 = vmand %vm43, %vm41
    %v46 = vadd.s32 %v32, 16
    %v47 = vadd.s32 %v39, 16
    %v48 = vsel %vm44, %v46, %v32
    %v49 = vsel %vm45, %v47, %v39
    %vm50 = vcmp.eq.s32.totalorder %v48, 15
    %vm51 = vcmp.eq.s32.totalorder %v49, 15
    %v52 = vsel %vm50, -inf, inf
    %v53 = vsel %vm51, -inf, inf
    %54 = vrot.lane.b32.xlu0 %v21, 127
    %v55 = vpop.permute.xlu0 %54
    %56 = vrot.lane.b32.xlu0 %v22, 127
    %v57 = vpop.permute.xlu0 %56
    %vm58 = vcmp.lt.s32.totalorder %v24, 127
    %v59 = vsel %vm58, %v55, %v57
    %v60 = vsel %vm58, %v57, %v55
    %v61 = vmin.f32 %v59, %v52
    %v62 = vmin.f32 %v60, %v53
    %v63 = vmax.f32 %v21, %v61
    %v64 = vmax.f32 %v22, %v62
    %vm65 = vcmp.ge.s32.totalorder %v24, 240
    %vm66 = vcmp.ge.s32.totalorder %v25, 240
    %v67 = vsel %vm65, -inf, inf
    %v68 = vsel %vm66, -inf, inf
    %69 = vrot.lane.b32.xlu0 %v63, 112
    %v70 = vpop.permute.xlu0 %69
    %71 = vrot.lane.b32.xlu0 %v64, 112
    %v72 = vpop.permute.xlu0 %71
    %vm73 = vcmp.lt.s32.totalorder %v24, 112
    %v74 = vsel %vm73, %v70, %v72
    %v75 = vsel %vm73, %v72, %v70
    %v76 = vmin.f32 %v74, %v67
    %v77 = vmin.f32 %v75, %v68
    %v78 = vmax.f32 %v63, %v76
    %v79 = vmax.f32 %v64, %v77
    %80 = vst [vmem:[#allocation5] sm:$0xff] %v78
    %81 = vst [vmem:[#allocation5 + $0x8] sm:$0xff] %v79
    // Predicated region
    $region10: #{tpu_custom_call.1} parent=1 // pred_check
      _
    $region11: #{tpu_custom_call.1} parent=1 // pred_check_branch
      %83 = sbr.rel (0) target = $region13
    $region12: #{tpu_custom_call.1} parent=1 // pred_region
      %s85 = ssub.s32 256, 256
      %86 = vsyncadd [#allocation4], %s85
      %s88 = sshll.u32 [#allocation5], 4
      %s89 = int_to_ptr.vmem [resolvable:$true] %s88
      %91 = dma.vmem_to_hbm [thread:$0]  %s89, 256, %s1, [#allocation4]
    $region13: #{tpu_custom_call.1} parent=1 // pred_fallthru
      _
    // Predicated region
    $region14: #{tpu_custom_call.1} parent=1 // pred_check
      _
    $region15: #{tpu_custom_call.1} parent=1 // pred_check_branch
      %93 = sbr.rel (0) target = $region17
    $region16: #{tpu_custom_call.1} parent=1 // pred_region
      %94 = dma.done [#allocation4], 256
    $region17: #{tpu_custom_call.1} parent=1 // pred_fallthru
      _
    %95 = vsyncpa [#allocation3], 1
    %96 = vsyncpa [#allocation4], 1

</llo_original>
